<compile_context>
chip_gen: v5e
topology: v5e:2x2
jax: 0.10.0
libtpu: 0.0.40
codegen_flags: <defaults>
</compile_context>

<pallas_src>
import functools

import numpy as np

import jax
import jax.numpy as jnp
from jax.experimental import pallas as pl
from jax.experimental.pallas import tpu as pltpu


def _round_up(x, m):
    return ((x + m - 1) // m) * m


# --------------------------------------------------------------------------
# Kernel
# --------------------------------------------------------------------------
def _embedder_kernel(x_ref, w1_ref, b1_ref, w2_ref, b2_ref, o_ref):
    # x_ref : (tm, cin_p)      native dtype row tile (cast here, not in wrapper)
    # w1_ref: (cin_p, cout_p)  compute-dtype weights (possibly block-diagonal)
    # b1_ref: (1, cout_p)      f32
    # w2_ref: (cout_p, cout_p)
    # b2_ref: (1, cout_p)      f32
    # o_ref : (tm, cout_p)     out_dtype
    x = x_ref[...].astype(w1_ref.dtype)                       # free VPU cast
    h = jnp.dot(x, w1_ref[...], preferred_element_type=jnp.float32)
    h = jnp.maximum(h + b1_ref[...], 0.0)                     # bias + ReLU (f32)
    y = jnp.dot(h.astype(w2_ref.dtype), w2_ref[...],
                preferred_element_type=jnp.float32)
    o_ref[...] = (y + b2_ref[...]).astype(o_ref.dtype)


# --------------------------------------------------------------------------
# Per-generation defaults
# --------------------------------------------------------------------------
def _device_defaults():
    """Returns (row_tile, vmem_cap_bytes, pack_input_lanes, min_grid_steps)."""
    try:
        kind = jax.devices()[0].device_kind.lower()
    except Exception:  # pragma: no cover - defensive
        kind = ""
    if "v5e" in kind or "v5 lite" in kind or "v5lite" in kind:
        # v5e: 16 MiB scoped default, less compute headroom -> k=4, tm=4096.
        return 4096, 64 << 20, False, 1
    if "v6" in kind:
        return 8192, 100 << 20, True, 1
    if "v7" in kind:
        # v7x: 64 MiB physical VMEM per TC, 2 TensorCores per chip.
        return 8192, 56 << 20, True, 2
    # Unknown generation: conservative tile, leave the compiler defaults.
    return 2048, None, False, 1


def select_pack_k(c_in, c_out, pack_input_lanes=False):
    """How many logical rows to fold into one 128-lane output row."""
    if c_out <= 0 or c_out >= 128 or 128 % c_out != 0:
        return 1
    k = 128 // c_out                       # lane-dense output stores
    if pack_input_lanes and c_in > 0:
        kk = k
        while (kk * c_in) % 128 != 0 and kk * c_out < 512:
            kk *= 2
        if (kk * c_in) % 128 == 0:
            k = kk                         # also lane-dense x loads (v6e/v7x)
    return k


# --------------------------------------------------------------------------
# One-time weight packing (hoisted out of the per-call path)
# --------------------------------------------------------------------------
def pack_params(w1, b1, w2, b2, *, k=1, compute_dtype=jnp.bfloat16):
    """Build block-diagonal packed weights; call once and reuse.

    w1: (c_in, c_out), w2: (c_out, c_out) (transposed vs. torch Linear.weight),
    b1/b2: (c_out,) or (1, c_out).
    """
    w1 = jnp.asarray(w1)
    w2 = jnp.asarray(w2)
    b1 = jnp.asarray(b1).reshape(1, -1)
    b2 = jnp.asarray(b2).reshape(1, -1)
    if k > 1:
        eye = jnp.eye(k, dtype=w1.dtype)
        w1 = jnp.kron(eye, w1)             # (k*c_in, k*c_out), block-diagonal
        w2 = jnp.kron(eye, w2)             # (k*c_out, k*c_out)
        b1 = jnp.tile(b1, (1, k))
        b2 = jnp.tile(b2, (1, k))
    return (w1.astype(compute_dtype), b1.astype(jnp.float32),
            w2.astype(compute_dtype), b2.astype(jnp.float32))


# --------------------------------------------------------------------------
# Forward
# --------------------------------------------------------------------------
@functools.partial(
    jax.jit,
    static_argnames=("k", "tm", "out_dtype", "vmem_cap", "min_grid"))
def _forward_packed(x, w1p, b1p, w2p, b2p, *, k, tm, out_dtype, vmem_cap,
                    min_grid):
    out_dtype = np.dtype(out_dtype)
    cin_p, cout_p = w1p.shape
    c_in = cin_p // k
    c_out = cout_p // k
    lead = x.shape[:-1]
    assert x.shape[-1] == c_in, (x.shape, c_in)

    x2 = x.reshape(-1, c_in)               # free contiguous reshape
    m = x2.shape[0]

    # Always take the lane-dense packed path: pad up to a multiple of k
    # (<= k-1 dummy rows) instead of falling back to masked 32-lane stores.
    m_pad = _round_up(m, k)
    if m_pad != m:
        x2 = jnp.pad(x2, ((0, m_pad - m), (0, 0)))
    xp = x2.reshape(m_pad // k, cin_p)      # free contiguous reshape
    rows = xp.shape[0]

    # ---- row-tile selection ----------------------------------------------
    tm_eff = min(tm, _round_up(rows, 8))
    if tm_eff >= 16:
        tm_eff = _round_up(tm_eff, 16)      # bf16 sublane pack
    if min_grid > 1 and rows > 2048:
        # >=2 grid steps so "parallel" can shard across both v7x TensorCores.
        tm_eff = min(tm_eff, _round_up(pl.cdiv(rows, min_grid), 16))

    def vmem_estimate(t):
        return (2 * t * cin_p * x.dtype.itemsize            # double-buffered x
                + 2 * t * cout_p * out_dtype.itemsize       # double-buffered out
                + 2 * t * cout_p * 4                        # f32 h / y scratch
                + 4 * (cin_p * cout_p + cout_p * cout_p)    # weights (2 bufs)
                * w1p.dtype.itemsize)

    compiler_kwargs = dict(dimension_semantics=("parallel",))
    if vmem_cap is not None:
        while tm_eff > 256 and vmem_estimate(tm_eff) + (8 << 20) > vmem_cap:
            tm_eff = max(256, _round_up(tm_eff // 2, 16))
        compiler_kwargs["vmem_limit_bytes"] = int(
            min(vmem_cap, max(32 << 20, vmem_estimate(tm_eff) + (8 << 20))))

    grid = (pl.cdiv(rows, tm_eff),)         # partial last block is masked

    out = pl.pallas_call(
        _embedder_kernel,
        out_shape=jax.ShapeDtypeStruct((rows, cout_p), out_dtype),
        grid_spec=pltpu.PrefetchScalarGridSpec(
            num_scalar_prefetch=0,
            grid=grid,
            in_specs=[
                pl.BlockSpec((tm_eff, cin_p), lambda i: (i, 0)),
                pl.BlockSpec((cin_p, cout_p), lambda i: (0, 0)),
                pl.BlockSpec((1, cout_p), lambda i: (0, 0)),
                pl.BlockSpec((cout_p, cout_p), lambda i: (0, 0)),
                pl.BlockSpec((1, cout_p), lambda i: (0, 0)),
            ],
            out_specs=pl.BlockSpec((tm_eff, cout_p), lambda i: (i, 0)),
        ),
        compiler_params=pltpu.CompilerParams(**compiler_kwargs),
    )(xp, w1p, b1p, w2p, b2p)

    out = out.reshape(m_pad, c_out)         # free contiguous reshape
    if m_pad != m:
        out = out[:m]
    return out.reshape(*lead, c_out)


def decoy_angle_embedder_packed(x, packed, *, k, tm=None, out_dtype=None):
    """Fast path: weights already packed with `pack_params`."""
    tm_d, vmem_cap, _, min_grid = _device_defaults()
    return _forward_packed(
        x, *packed, k=k,
        tm=int(tm if tm is not None else tm_d),
        out_dtype=(x.dtype if out_dtype is None else out_dtype),
        vmem_cap=vmem_cap, min_grid=min_grid)


def decoy_angle_embedder(x, w1, b1, w2, b2, *, tm=None,
                         compute_dtype=jnp.bfloat16, out_dtype=None):
    """x: [*, N_templ, N_res, c_in] -> [*, N_templ, N_res, c_out].

    Convenience one-shot entry (packs weights per call).  For repeated calls
    pack once with `pack_params` and use `decoy_angle_embedder_packed`.
    out_dtype=jnp.bfloat16 halves output HBM traffic (the biggest lever on
    this bandwidth-bound kernel); the default keeps x.dtype.
    """
    tm_d, vmem_cap, pack_in, min_grid = _device_defaults()
    c_in, c_out = w1.shape
    k = select_pack_k(c_in, c_out, pack_in)
    packed = pack_params(w1, b1, w2, b2, k=k, compute_dtype=compute_dtype)
    return _forward_packed(
        x, *packed, k=k,
        tm=int(tm if tm is not None else tm_d),
        out_dtype=(x.dtype if out_dtype is None else out_dtype),
        vmem_cap=vmem_cap, min_grid=min_grid)


# --------------------------------------------------------------------------
# Synthetic params + pure-JAX reference
# --------------------------------------------------------------------------
def init_params(key, c_in, c_out, dtype=jnp.float32):
    """Deterministic synthetic init (He-style 'relu' scaling, small biases)."""
    k1, k2, k3, k4 = jax.random.split(key, 4)
    # PyTorch Linear weight is (out, in); store transposed for x @ W layout.
    w1 = (jax.random.normal(k1, (c_out, c_in), dtype)
          * jnp.sqrt(2.0 / c_in)).T                          # (c_in, c_out)
    b1 = jax.random.normal(k2, (1, c_out), dtype) * 0.1
    w2 = (jax.random.normal(k3, (c_out, c_out), dtype)
          * jnp.sqrt(2.0 / c_out)).T                         # (c_out, c_out)
    b2 = jax.random.normal(k4, (1, c_out), dtype) * 0.1
    return w1, b1, w2, b2


def reference(x, w1, b1, w2, b2, compute_dtype=jnp.bfloat16):
    """Pure-JAX reference mirroring the kernel's compute-dtype / f32-accum math."""
    xc = x.astype(compute_dtype)
    h = jnp.dot(xc, w1.astype(compute_dtype),
                preferred_element_type=jnp.float32) + b1[0].astype(jnp.float32)
    h = jnp.maximum(h, 0.0)
    y = jnp.dot(h.astype(compute_dtype), w2.astype(compute_dtype),
                preferred_element_type=jnp.float32) + b2[0].astype(jnp.float32)
    return y


# --------------------------------------------------------------------------
if __name__ == "__main__":
    # Small shapes consistent with the module: [batch, N_templ, N_res, c_in]
    batch, n_templ, n_res = 2, 2, 8
    c_in, c_m, c_out = 16, 32, 32     # c_m is unused by the forward pass

    key = jax.random.PRNGKey(0)
    kx, kp = jax.random.split(key)
    x = jax.random.normal(kx, (batch, n_templ, n_res, c_in), jnp.float32)
    w1, b1, w2, b2 = init_params(kp, c_in, c_out)

    # One-time weight packing, hoisted out of the per-call path.
    _, _, pack_in, _ = _device_defaults()
    k = select_pack_k(c_in, c_out, pack_in)
    packed = pack_params(w1, b1, w2, b2, k=k)

    # Main check: f32 output vs. reference with matching bf16/f32-accum math.
    y = decoy_angle_embedder_packed(x, packed, k=k)
    y = jax.block_until_ready(y)
    y_ref = reference(x, w1, b1, w2, b2)
    assert y.shape == (batch, n_templ, n_res, c_out), y.shape
    max_err = float(jnp.max(jnp.abs(y - y_ref)))
    assert max_err < 1e-3, max_err

    # Exercise the row-padding (rows % k != 0) and bf16-output paths.
    x2 = jax.random.normal(kx, (batch, n_templ, 7, c_in), jnp.float32)
    y2 = decoy_angle_embedder(x2, w1, b1, w2, b2, out_dtype=jnp.bfloat16)
    y2 = jax.block_until_ready(y2)
    y2_ref = reference(x2, w1, b1, w2, b2)
    assert y2.shape == (batch, n_templ, 7, c_out), y2.shape
    err2 = float(jnp.max(jnp.abs(y2.astype(jnp.float32) - y2_ref)))
    assert err2 < 5e-2, err2

    print("KERNEL_OK")
</pallas_src>

<mosaic_0001>
module attributes {stable_mosaic.version = 11 : i64} {
  func.func @_embedder_kernel(%arg0: i32, %arg1: memref<8x64xf32, #tpu.memory_space<vmem>>, %arg2: memref<64x128xbf16, #tpu.memory_space<vmem>>, %arg3: memref<1x128xf32, #tpu.memory_space<vmem>>, %arg4: memref<128x128xbf16, #tpu.memory_space<vmem>>, %arg5: memref<1x128xf32, #tpu.memory_space<vmem>>, %arg6: memref<8x128xf32, #tpu.memory_space<vmem>>) attributes {dimension_semantics = [#tpu.dimension_semantics<parallel>], iteration_bounds = array<i64: 1>, scalar_prefetch = 0 : i64, scratch_operands = 0 : i64, tpu.core_type = #tpu.core_type<tc>, window_params = [{transform_indices = @transform_0, window_bounds = array<i64: 8, 64>}, {pipeline_mode = #tpu.pipeline_mode<synchronous>, transform_indices = @transform_1, window_bounds = array<i64: 64, 128>}, {pipeline_mode = #tpu.pipeline_mode<synchronous>, transform_indices = @transform_2, window_bounds = array<i64: 1, 128>}, {pipeline_mode = #tpu.pipeline_mode<synchronous>, transform_indices = @transform_3, window_bounds = array<i64: 128, 128>}, {pipeline_mode = #tpu.pipeline_mode<synchronous>, transform_indices = @transform_4, window_bounds = array<i64: 1, 128>}, {transform_indices = @transform_5, window_bounds = array<i64: 8, 128>}]} {
    %c0 = arith.constant 0 : index
    %c0_0 = arith.constant 0 : index
    %0 = vector.load %arg1[%c0, %c0_0] : memref<8x64xf32, #tpu.memory_space<vmem>>, vector<8x64xf32>
    %1 = arith.truncf %0 : vector<8x64xf32> to vector<8x64xbf16>
    %c0_1 = arith.constant 0 : index
    %c0_2 = arith.constant 0 : index
    %2 = vector.load %arg2[%c0_1, %c0_2] : memref<64x128xbf16, #tpu.memory_space<vmem>>, vector<64x128xbf16>
    %cst = arith.constant dense<0.000000e+00> : vector<8x128xf32>
    %3 = tpu.matmul %1, %2, %cst {dimension_numbers = #tpu.dot_dimension_numbers<[1], [0], [0], [1], [0, 0, 1, 1], [], []>} : vector<8x64xbf16>, vector<64x128xbf16>, vector<8x128xf32> -> vector<8x128xf32>
    %c0_3 = arith.constant 0 : index
    %c0_4 = arith.constant 0 : index
    %4 = vector.load %arg3[%c0_3, %c0_4] : memref<1x128xf32, #tpu.memory_space<vmem>>, vector<1x128xf32>
    %5 = vector.broadcast %4 : vector<1x128xf32> to vector<8x128xf32>
    %6 = arith.addf %3, %5 : vector<8x128xf32>
    %cst_5 = arith.constant 0.000000e+00 : f32
    %7 = vector.broadcast %cst_5 : f32 to vector<8x128xf32>
    %8 = arith.maximumf %6, %7 : vector<8x128xf32>
    %9 = arith.truncf %8 : vector<8x128xf32> to vector<8x128xbf16>
    %c0_6 = arith.constant 0 : index
    %c0_7 = arith.constant 0 : index
    %10 = vector.load %arg4[%c0_6, %c0_7] : memref<128x128xbf16, #tpu.memory_space<vmem>>, vector<128x128xbf16>
    %cst_8 = arith.constant dense<0.000000e+00> : vector<8x128xf32>
    %11 = tpu.matmul %9, %10, %cst_8 {dimension_numbers = #tpu.dot_dimension_numbers<[1], [0], [0], [1], [0, 0, 1, 1], [], []>} : vector<8x128xbf16>, vector<128x128xbf16>, vector<8x128xf32> -> vector<8x128xf32>
    %c0_9 = arith.constant 0 : index
    %c0_10 = arith.constant 0 : index
    %12 = vector.load %arg5[%c0_9, %c0_10] : memref<1x128xf32, #tpu.memory_space<vmem>>, vector<1x128xf32>
    %13 = vector.broadcast %12 : vector<1x128xf32> to vector<8x128xf32>
    %14 = arith.addf %11, %13 : vector<8x128xf32>
    %c0_11 = arith.constant 0 : index
    %c0_12 = arith.constant 0 : index
    %15 = vector.load %arg6[%c0_11, %c0_12] : memref<8x128xf32, #tpu.memory_space<vmem>>, vector<8x128xf32>
    tpu.vector_store %arg6[%c0_11, %c0_12], %14 {strides = array<i32>} : memref<8x128xf32, #tpu.memory_space<vmem>>, vector<8x128xf32>,
    return
  }
  func.func @transform_0(%arg0: i32) -> (i32, i32) {
    %c0_i32 = arith.constant 0 : i32
    %c0_i32_0 = arith.constant 0 : i32
    return %arg0, %c0_i32 : i32, i32
  }
  func.func @transform_1(%arg0: i32) -> (i32, i32) {
    %c0_i32 = arith.constant 0 : i32
    %c0_i32_0 = arith.constant 0 : i32
    %c0_i32_1 = arith.constant 0 : i32
    return %c0_i32, %c0_i32_0 : i32, i32
  }
  func.func @transform_2(%arg0: i32) -> (i32, i32) {
    %c0_i32 = arith.constant 0 : i32
    %c0_i32_0 = arith.constant 0 : i32
    %c0_i32_1 = arith.constant 0 : i32
    return %c0_i32, %c0_i32_0 : i32, i32
  }
  func.func @transform_3(%arg0: i32) -> (i32, i32) {
    %c0_i32 = arith.constant 0 : i32
    %c0_i32_0 = arith.constant 0 : i32
    %c0_i32_1 = arith.constant 0 : i32
    return %c0_i32, %c0_i32_0 : i32, i32
  }
  func.func @transform_4(%arg0: i32) -> (i32, i32) {
    %c0_i32 = arith.constant 0 : i32
    %c0_i32_0 = arith.constant 0 : i32
    %c0_i32_1 = arith.constant 0 : i32
    return %c0_i32, %c0_i32_0 : i32, i32
  }
  func.func @transform_5(%arg0: i32) -> (i32, i32) {
    %c0_i32 = arith.constant 0 : i32
    %c0_i32_0 = arith.constant 0 : i32
    return %arg0, %c0_i32 : i32, i32
  }
}

</mosaic_0001>

<llo_original>
// kernel: _forward_packed.1
$region0: #{_forward_packed.1}
  #allocation0 [shape = 'u32[]', space=smem, size = 0x4, offset = 0x4, fixed_abs, tag = 'smem constant byte address 0x4 - core index']
  #allocation1 [shape = 'u32[72,128]{1,0:T(1,128)}', space=vmem, size = 0x9000, scoped, tag = 'internal scratch']
  %s0 = inlined_call_operand.vmem [shape: f32[8,64], index: 0, kind: input, shape index: {}]
  %s1 = inlined_call_operand.vmem [shape: bf16[64,128], index: 1, kind: input, shape index: {}]
  %s2 = inlined_call_operand.vmem [shape: f32[1,128], index: 2, kind: input, shape index: {}]
  %s3 = inlined_call_operand.hbm [shape: bf16[128,128], index: 3, kind: input, shape index: {}]
  %s4 = inlined_call_operand.vmem [shape: f32[1,128], index: 4, kind: input, shape index: {}]
  %s5 = inlined_call_operand.vmem [shape: f32[8,128], index: 5, kind: output, shape index: {}]
  %s6 = sld [smem:[#allocation0]]
  $region34: #{_forward_packed.1} parent=0
    _
  %s8 = ssub.s32 1, %s6
  %s9 = scalar_select 0, %s8, %s6
  $region1: #{_forward_packed.1} parent=0
    #allocation2 [shape = 'u8[32768]{0}', space=vmem, size = 0x8000, scoped, tag = 'input window, operand 3, single buffered']
    #allocation3 [shape = 's32[1]{0}', space=sflag, size = 0x4, scoped, tag = 'scoped memory for _forward_packed.1']
    %10 = vsyncpa [#allocation3], 0
    // Predicated region
    $region2: #{_forward_packed.1} parent=1 // pred_check
      _
    $region3: #{_forward_packed.1} parent=1 // pred_check_branch
      %12 = sbr.rel (0) target = $region5
    $region4: #{_forward_packed.1} parent=1 // pred_region
      _
    $region5: #{_forward_packed.1} parent=1 // pred_fallthru
      _
    // Predicated region
    $region6: #{_forward_packed.1} parent=1 // pred_check
      _
    $region7: #{_forward_packed.1} parent=1 // pred_check_branch
      %14 = sbr.rel (0) target = $region9
    $region8: #{_forward_packed.1} parent=1 // pred_region
      _
    $region9: #{_forward_packed.1} parent=1 // pred_fallthru
      _
    // Predicated region
    $region10: #{_forward_packed.1} parent=1 // pred_check
      _
    $region11: #{_forward_packed.1} parent=1 // pred_check_branch
      %16 = sbr.rel (0) target = $region13
    $region12: #{_forward_packed.1} parent=1 // pred_region
      _
    $region13: #{_forward_packed.1} parent=1 // pred_fallthru
      _
    // Predicated region
    $region14: #{_forward_packed.1} parent=1 // pred_check
      _
    $region15: #{_forward_packed.1} parent=1 // pred_check_branch
      %18 = sbr.rel (0) target = $region17
    $region16: #{_forward_packed.1} parent=1 // pred_region
      %20 = vsyncadd [#allocation3], 0
      %s21 = sshll.u32 %s3, 4
      %s22 = int_to_ptr.hbm [resolvable:$true] %s21
      %s23 = sshll.u32 [#allocation2], 4
      %s24 = int_to_ptr.vmem [resolvable:$true] %s23
      %29 = dma.hbm_to_vmem [thread:$0]  %s22, 1024, %s24, [#allocation3], 64, 64, 4
    $region17: #{_forward_packed.1} parent=1 // pred_fallthru
      _
    // Predicated region
    $region18: #{_forward_packed.1} parent=1 // pred_check
      _
    $region19: #{_forward_packed.1} parent=1 // pred_check_branch
      %31 = sbr.rel (0) target = $region21
    $region20: #{_forward_packed.1} parent=1 // pred_region
      _
    $region21: #{_forward_packed.1} parent=1 // pred_fallthru
      _
    // Predicated region
    $region22: #{_forward_packed.1} parent=1 // pred_check
      _
    $region23: #{_forward_packed.1} parent=1 // pred_check_branch
      %33 = sbr.rel (0) target = $region25
    $region24: #{_forward_packed.1} parent=1 // pred_region
      %35 = dma.done [#allocation3], 1024
    $region25: #{_forward_packed.1} parent=1 // pred_fallthru
      _
    %v37 = vld [vmem:[%s0] sm:$0xff]
    %v38 = vpack.c.bf16 %v37, %v37
    %v39 = vld [vmem:[%s1] sm:$0xf]
    %v40 = vld [vmem:[%s1 + $0x4] sm:$0xf]
    %v41 = vld [vmem:[%s1 + $0x8] sm:$0xf]
    %v42 = vld [vmem:[%s1 + $0xc] sm:$0xf]
    %v43 = vld [vmem:[%s1 + $0x10] sm:$0xf]
    %v44 = vld [vmem:[%s1 + $0x14] sm:$0xf]
    %v45 = vld [vmem:[%s1 + $0x18] sm:$0xf]
    %v46 = vld [vmem:[%s1 + $0x1c] sm:$0xf]
    %v47 = vld [vmem:[%s2] sm:$0x1]
    %v49 = vperm.slane %v47, 0
    %v59 = vunpack.c.l.b16 %v39
    %v60 = vunpack.c.l.b16 %v40
    %v61 = vunpack.c.l.b16 %v41
    %v62 = vunpack.c.l.b16 %v42
    %v63 = vunpack.c.l.b16 %v43
    %v64 = vunpack.c.l.b16 %v44
    %v65 = vunpack.c.l.b16 %v45
    %v66 = vunpack.c.l.b16 %v46
    %v67 = vpack.c.b16 %v60, %v59
    %v68 = vpack.c.b16 %v62, %v61
    %v69 = vpack.c.b16 %v64, %v63
    %v70 = vpack.c.b16 %v66, %v65
    %vm75 = vcmask 523264
    %v77 = vsel %vm75, %v38, 0
    %79 = vmatpush.bf16.msra.mxu0 0
    %80 = vmatpush.bf16.msra.mxu0 0
    %81 = vmatpush.bf16.msra.mxu0 0
    %82 = vmatpush.bf16.msra.mxu0 0
    %83 = vmatpush.bf16.msra.mxu0 %v70
    %84 = vmatpush.bf16.msra.mxu0 %v69
    %85 = vmatpush.bf16.msra.mxu0 %v68
    %86 = vmatpush.bf16.msra.mxu0 %v67
    %87 = vmatmul.bf16.gmra.mxu0 %v77
    %v88 = vpop.f32.mrf.mxu0
    %v89 = vadd.f32 %v49, %v88
    %v90 = vpop.f32.mrf.mxu0
    %91 = vdwg.mxu0
    %v92 = vmax.f32 %v89, 0.0
    %v93 = vpack.c.bf16 %v92, %v92
    %v94 = vld [vmem:[#allocation2] sm:$0xf]
    %v95 = vld [vmem:[#allocation2 + $0x4] sm:$0xf]
    %v96 = vld [vmem:[#allocation2 + $0x8] sm:$0xf]
    %v97 = vld [vmem:[#allocation2 + $0xc] sm:$0xf]
    %v98 = vld [vmem:[#allocation2 + $0x10] sm:$0xf]
    %v99 = vld [vmem:[#allocation2 + $0x14] sm:$0xf]
    %v100 = vld [vmem:[#allocation2 + $0x18] sm:$0xf]
    %v101 = vld [vmem:[#allocation2 + $0x1c] sm:$0xf]
    %v102 = vld [vmem:[#allocation2 + $0x20] sm:$0xf]
    %v103 = vld [vmem:[#allocation2 + $0x24] sm:$0xf]
    %v104 = vld [vmem:[#allocation2 + $0x28] sm:$0xf]
    %v105 = vld [vmem:[#allocation2 + $0x2c] sm:$0xf]
    %v106 = vld [vmem:[#allocation2 + $0x30] sm:$0xf]
    %v107 = vld [vmem:[#allocation2 + $0x34] sm:$0xf]
    %v108 = vld [vmem:[#allocation2 + $0x38] sm:$0xf]
    %v109 = vld [vmem:[#allocation2 + $0x3c] sm:$0xf]
    %v110 = vld [vmem:[%s4] sm:$0x1]
    %v112 = vperm.slane %v110, 0
    %v130 = vunpack.c.l.b16 %v94
    %v131 = vunpack.c.l.b16 %v95
    %v132 = vunpack.c.l.b16 %v96
    %v133 = vunpack.c.l.b16 %v97
    %v134 = vunpack.c.l.b16 %v98
    %v135 = vunpack.c.l.b16 %v99
    %v136 = vunpack.c.l.b16 %v100
    %v137 = vunpack.c.l.b16 %v101
    %v138 = vunpack.c.l.b16 %v102
    %v139 = vunpack.c.l.b16 %v103
    %v140 = vunpack.c.l.b16 %v104
    %v141 = vunpack.c.l.b16 %v105
    %v142 = vunpack.c.l.b16 %v106
    %v143 = vunpack.c.l.b16 %v107
    %v144 = vunpack.c.l.b16 %v108
    %v145 = vunpack.c.l.b16 %v109
    %v146 = vpack.c.b16 %v131, %v130
    %v147 = vpack.c.b16 %v133, %v132
    %v148 = vpack.c.b16 %v135, %v134
    %v149 = vpack.c.b16 %v137, %v136
    %v150 = vpack.c.b16 %v139, %v138
    %v151 = vpack.c.b16 %v141, %v140
    %v152 = vpack.c.b16 %v143, %v142
    %v153 = vpack.c.b16 %v145, %v144
    %162 = vmatpush.bf16.msra.mxu0 %v153
    %163 = vmatpush.bf16.msra.mxu0 %v152
    %164 = vmatpush.bf16.msra.mxu0 %v151
    %165 = vmatpush.bf16.msra.mxu0 %v150
    %166 = vmatpush.bf16.msra.mxu0 %v149
    %167 = vmatpush.bf16.msra.mxu0 %v148
    %168 = vmatpush.bf16.msra.mxu0 %v147
    %169 = vmatpush.bf16.msra.mxu0 %v146
    %170 = vmatmul.bf16.gmra.mxu0 %v93
    %v171 = vpop.f32.mrf.mxu0
    %v172 = vadd.f32 %v112, %v171
    %v173 = vpop.f32.mrf.mxu0
    %174 = vdwg.mxu0
    %175 = vst [vmem:[%s5] sm:$0xff] %v172
    // Predicated region
    $region26: #{_forward_packed.1} parent=1 // pred_check
      _
    $region27: #{_forward_packed.1} parent=1 // pred_check_branch
      %177 = sbr.rel (0) target = $region29
    $region28: #{_forward_packed.1} parent=1 // pred_region
      _
    $region29: #{_forward_packed.1} parent=1 // pred_fallthru
      _
    // Predicated region
    $region30: #{_forward_packed.1} parent=1 // pred_check
      _
    $region31: #{_forward_packed.1} parent=1 // pred_check_branch
      %179 = sbr.rel (0) target = $region33
    $region32: #{_forward_packed.1} parent=1 // pred_region
      _
    $region33: #{_forward_packed.1} parent=1 // pred_fallthru
      _
    %180 = vsyncpa [#allocation3], 1

</llo_original>
